<compile_context>
chip_gen: v7x
topology: tpu7x:2x2x1
jax: 0.10.0
libtpu: 0.0.40
codegen_flags: <defaults>
</compile_context>

<pallas_src>
import functools

import numpy as np
import jax
import jax.numpy as jnp
from jax.experimental import pallas as pl
from jax.experimental.pallas import tpu as pltpu


def _round_up(a: int, b: int) -> int:
    return (a + b - 1) // b * b


def _erf_poly(z):
    """erf via Abramowitz & Stegun 7.1.26 (max abs error 1.5e-7)."""
    a1, a2, a3, a4, a5 = (0.254829592, -0.284496736, 1.421413741,
                          -1.453152027, 1.061405429)
    p = 0.3275911
    az = jnp.abs(z)
    t = 1.0 / (1.0 + p * az)
    poly = t * (a1 + t * (a2 + t * (a3 + t * (a4 + t * a5))))
    e = 1.0 - poly * jnp.exp(-az * az)
    return jnp.where(z < 0.0, -e, e)


def _gelu_exact(h):
    """Exact GELU: 0.5 * h * (1 + erf(h / sqrt(2))) - matches nn.GELU()."""
    inv_sqrt2 = 0.7071067811865476
    return 0.5 * h * (1.0 + _erf_poly(h * inv_sqrt2))


def _mlp_block_kernel(x_ref, w1_ref, w2_ref, g_ref, b_ref, o_ref, *, eps):
    x = x_ref[...]                                                  # (tB, F)
    # ---- Linear 1 (MXU) + exact GELU ----
    h = jnp.dot(x, w1_ref[...], preferred_element_type=jnp.float32)  # (tB, H)
    h = _gelu_exact(h)
    # ---- Linear 2 (MXU) + residual ----
    y = jnp.dot(h, w2_ref[...], preferred_element_type=jnp.float32)  # (tB, F)
    r = y + x
    # ---- LayerNorm over the feature (lane) axis ----
    mean = jnp.mean(r, axis=-1, keepdims=True)
    c = r - mean
    var = jnp.mean(c * c, axis=-1, keepdims=True)
    inv = jax.lax.rsqrt(var + eps)
    o_ref[...] = ((c * inv) * g_ref[...] + b_ref[...]).astype(o_ref.dtype)


def mlp_block_forward(x, w1, w2, gamma, beta, *, eps=1e-5, row_tile=256):
    """Pallas TPU forward of MLPBlock.

    x:     [..., F]  activations (residual requires in_features == out_features).
    w1:    [F, H]    == torch `linear1.weight.T`   (H = F * multiplier)
    w2:    [H, F]    == torch `linear2.weight.T`
    gamma: [F], beta: [F]   LayerNorm affine params (eps matches torch default).
    """
    orig_shape = x.shape
    F = orig_shape[-1]
    H = w1.shape[1]
    assert w1.shape == (F, H) and w2.shape == (H, F)
    assert gamma.shape == (F,) and beta.shape == (F,)
    lead = orig_shape[:-1]
    N = int(np.prod(lead)) if lead else 1

    xf = x.reshape(N, F).astype(jnp.float32)
    w1f = w1.astype(jnp.float32)
    w2f = w2.astype(jnp.float32)
    g2 = gamma.reshape(1, F).astype(jnp.float32)
    b2 = beta.reshape(1, F).astype(jnp.float32)

    # Large row tile; pad the ragged tail (instead of collapsing to one giant
    # tile) so per-step overhead is amortised, VMEM stays bounded, and big N
    # still produces a multi-step grid for megacore sharding.
    tB = min(_round_up(max(row_tile, 8), 8), _round_up(N, 8))
    n_pad = _round_up(N, tB)
    if n_pad != N:
        xf = jnp.pad(xf, ((0, n_pad - N), (0, 0)))
    grid = (n_pad // tB,)

    kernel = functools.partial(_mlp_block_kernel, eps=float(eps))

    cost = pl.CostEstimate(
        flops=4 * n_pad * F * H,                 # two matmuls: 2*N*F*H each
        transcendentals=n_pad * H,               # one exp per GELU activation
        bytes_accessed=4 * (2 * n_pad * F + 2 * F * H + 2 * F),
    )

    out = pl.pallas_call(
        kernel,
        out_shape=jax.ShapeDtypeStruct((n_pad, F), jnp.float32),
        grid_spec=pltpu.PrefetchScalarGridSpec(
            num_scalar_prefetch=0,
            grid=grid,
            in_specs=[
                pl.BlockSpec((tB, F), lambda i: (i, 0)),  # x row tile
                pl.BlockSpec((F, H), lambda i: (0, 0)),   # W1 (VMEM-resident)
                pl.BlockSpec((H, F), lambda i: (0, 0)),   # W2 (VMEM-resident)
                pl.BlockSpec((1, F), lambda i: (0, 0)),   # gamma
                pl.BlockSpec((1, F), lambda i: (0, 0)),   # beta
            ],
            out_specs=pl.BlockSpec((tB, F), lambda i: (i, 0)),
        ),
        compiler_params=pltpu.CompilerParams(
            dimension_semantics=("parallel",)),
        cost_estimate=cost,
    )(xf, w1f, w2f, g2, b2)

    out = out[:N]
    return out.reshape(*lead, F) if lead else out.reshape(F)


def _mlp_block_ref(x, w1, w2, gamma, beta, eps=1e-5):
    """Plain-JAX reference mirroring the PyTorch forward."""
    x = x.astype(jnp.float32)
    h = jnp.dot(x, w1, precision=jax.lax.Precision.HIGHEST)
    h = jax.nn.gelu(h, approximate=False)             # exact-erf GELU (nn.GELU())
    y = jnp.dot(h, w2, precision=jax.lax.Precision.HIGHEST)
    r = y + x
    mean = jnp.mean(r, axis=-1, keepdims=True)
    var = jnp.mean((r - mean) ** 2, axis=-1, keepdims=True)
    return (r - mean) / jnp.sqrt(var + eps) * gamma + beta


if __name__ == "__main__":
    key = jax.random.PRNGKey(0)
    k1, k2, k3, k4, k5 = jax.random.split(key, 5)

    # Small, lane-dense shapes: batch=2, seq=8, features=128, multiplier=2.
    B, S, Fdim, mult = 2, 8, 128, 2
    H = Fdim * mult

    x = jax.random.normal(k1, (B, S, Fdim), dtype=jnp.float32)
    w1 = jax.random.normal(k2, (Fdim, H), dtype=jnp.float32) / np.sqrt(Fdim)
    w2 = jax.random.normal(k3, (H, Fdim), dtype=jnp.float32) / np.sqrt(H)
    gamma = 1.0 + 0.1 * jax.random.normal(k4, (Fdim,), dtype=jnp.float32)
    beta = 0.1 * jax.random.normal(k5, (Fdim,), dtype=jnp.float32)

    out = mlp_block_forward(x, w1, w2, gamma, beta)
    out = jax.block_until_ready(out)

    ref = _mlp_block_ref(x, w1, w2, gamma, beta)
    assert out.shape == (B, S, Fdim), out.shape
    np.testing.assert_allclose(np.asarray(out), np.asarray(ref),
                               rtol=1e-4, atol=1e-4)
    print("KERNEL_OK")
</pallas_src>

<mosaic_0001>
module attributes {stable_mosaic.version = 11 : i64} {
  func.func @_mlp_block_kernel(%arg0: i32, %arg1: memref<16x128xf32, #tpu.memory_space<vmem>>, %arg2: memref<128x256xf32, #tpu.memory_space<vmem>>, %arg3: memref<256x128xf32, #tpu.memory_space<vmem>>, %arg4: memref<1x128xf32, #tpu.memory_space<vmem>>, %arg5: memref<1x128xf32, #tpu.memory_space<vmem>>, %arg6: memref<16x128xf32, #tpu.memory_space<vmem>>) attributes {dimension_semantics = [#tpu.dimension_semantics<parallel>], iteration_bounds = array<i64: 1>, scalar_prefetch = 0 : i64, scratch_operands = 0 : i64, tpu.core_type = #tpu.core_type<tc>, window_params = [{transform_indices = @transform_0, window_bounds = array<i64: 16, 128>}, {pipeline_mode = #tpu.pipeline_mode<synchronous>, transform_indices = @transform_1, window_bounds = array<i64: 128, 256>}, {pipeline_mode = #tpu.pipeline_mode<synchronous>, transform_indices = @transform_2, window_bounds = array<i64: 256, 128>}, {pipeline_mode = #tpu.pipeline_mode<synchronous>, transform_indices = @transform_3, window_bounds = array<i64: 1, 128>}, {pipeline_mode = #tpu.pipeline_mode<synchronous>, transform_indices = @transform_4, window_bounds = array<i64: 1, 128>}, {transform_indices = @transform_5, window_bounds = array<i64: 16, 128>}]} {
    %c0 = arith.constant 0 : index
    %c0_0 = arith.constant 0 : index
    %0 = vector.load %arg1[%c0, %c0_0] : memref<16x128xf32, #tpu.memory_space<vmem>>, vector<16x128xf32>
    %c0_1 = arith.constant 0 : index
    %c0_2 = arith.constant 0 : index
    %1 = vector.load %arg2[%c0_1, %c0_2] : memref<128x256xf32, #tpu.memory_space<vmem>>, vector<128x256xf32>
    %cst = arith.constant dense<0.000000e+00> : vector<16x256xf32>
    %2 = tpu.matmul %0, %1, %cst {dimension_numbers = #tpu.dot_dimension_numbers<[1], [0], [0], [1], [0, 0, 1, 1], [], []>} : vector<16x128xf32>, vector<128x256xf32>, vector<16x256xf32> -> vector<16x256xf32>
    %cst_3 = arith.constant 5.000000e-01 : f32
    %3 = vector.broadcast %cst_3 : f32 to vector<16x256xf32>
    %4 = arith.mulf %3, %2 : vector<16x256xf32>
    %cst_4 = arith.constant 0.707106769 : f32
    %5 = vector.broadcast %cst_4 : f32 to vector<16x256xf32>
    %6 = arith.mulf %2, %5 : vector<16x256xf32>
    %7 = math.absf %6 : vector<16x256xf32>
    %cst_5 = arith.constant 0.327591091 : f32
    %8 = vector.broadcast %cst_5 : f32 to vector<16x256xf32>
    %9 = arith.mulf %8, %7 : vector<16x256xf32>
    %cst_6 = arith.constant 1.000000e+00 : f32
    %10 = vector.broadcast %cst_6 : f32 to vector<16x256xf32>
    %11 = arith.addf %10, %9 : vector<16x256xf32>
    %cst_7 = arith.constant 1.000000e+00 : f32
    %12 = vector.broadcast %cst_7 : f32 to vector<16x256xf32>
    %13 = arith.divf %12, %11 : vector<16x256xf32>
    %cst_8 = arith.constant 1.06140542 : f32
    %14 = vector.broadcast %cst_8 : f32 to vector<16x256xf32>
    %15 = arith.mulf %13, %14 : vector<16x256xf32>
    %cst_9 = arith.constant -1.45315206 : f32
    %16 = vector.broadcast %cst_9 : f32 to vector<16x256xf32>
    %17 = arith.addf %16, %15 : vector<16x256xf32>
    %18 = arith.mulf %13, %17 : vector<16x256xf32>
    %cst_10 = arith.constant 1.42141378 : f32
    %19 = vector.broadcast %cst_10 : f32 to vector<16x256xf32>
    %20 = arith.addf %19, %18 : vector<16x256xf32>
    %21 = arith.mulf %13, %20 : vector<16x256xf32>
    %cst_11 = arith.constant -0.284496725 : f32
    %22 = vector.broadcast %cst_11 : f32 to vector<16x256xf32>
    %23 = arith.addf %22, %21 : vector<16x256xf32>
    %24 = arith.mulf %13, %23 : vector<16x256xf32>
    %cst_12 = arith.constant 0.254829586 : f32
    %25 = vector.broadcast %cst_12 : f32 to vector<16x256xf32>
    %26 = arith.addf %25, %24 : vector<16x256xf32>
    %27 = arith.mulf %13, %26 : vector<16x256xf32>
    %cst_13 = arith.constant 0.000000e+00 : f32
    %28 = vector.broadcast %cst_13 : f32 to vector<16x256xf32>
    %29 = arith.subf %28, %7 : vector<16x256xf32>
    %30 = arith.mulf %29, %7 : vector<16x256xf32>
    %31 = math.exp %30 : vector<16x256xf32>
    %32 = arith.mulf %27, %31 : vector<16x256xf32>
    %cst_14 = arith.constant 1.000000e+00 : f32
    %33 = vector.broadcast %cst_14 : f32 to vector<16x256xf32>
    %34 = arith.subf %33, %32 : vector<16x256xf32>
    %cst_15 = arith.constant 0.000000e+00 : f32
    %35 = vector.broadcast %cst_15 : f32 to vector<16x256xf32>
    %36 = arith.cmpf olt, %6, %35 : vector<16x256xf32>
    %cst_16 = arith.constant 0.000000e+00 : f32
    %37 = vector.broadcast %cst_16 : f32 to vector<16x256xf32>
    %38 = arith.subf %37, %34 : vector<16x256xf32>
    %39 = arith.select %36, %38, %34 : vector<16x256xi1>, vector<16x256xf32>
    %cst_17 = arith.constant 1.000000e+00 : f32
    %40 = vector.broadcast %cst_17 : f32 to vector<16x256xf32>
    %41 = arith.addf %40, %39 : vector<16x256xf32>
    %42 = arith.mulf %4, %41 : vector<16x256xf32>
    %c0_18 = arith.constant 0 : index
    %c0_19 = arith.constant 0 : index
    %43 = vector.load %arg3[%c0_18, %c0_19] : memref<256x128xf32, #tpu.memory_space<vmem>>, vector<256x128xf32>
    %cst_20 = arith.constant dense<0.000000e+00> : vector<16x128xf32>
    %44 = tpu.matmul %42, %43, %cst_20 {dimension_numbers = #tpu.dot_dimension_numbers<[1], [0], [0], [1], [0, 0, 1, 1], [], []>} : vector<16x256xf32>, vector<256x128xf32>, vector<16x128xf32> -> vector<16x128xf32>
    %45 = arith.addf %44, %0 : vector<16x128xf32>
    %cst_21 = arith.constant dense<0.000000e+00> : vector<16xf32>
    %46 = vector.multi_reduction <add>, %45, %cst_21 [1] : vector<16x128xf32> to vector<16xf32>
    %47 = vector.shape_cast %46 : vector<16xf32> to vector<16x1xf32>
    %cst_22 = arith.constant 1.280000e+02 : f32
    %48 = vector.broadcast %cst_22 : f32 to vector<16x1xf32>
    %49 = arith.divf %47, %48 : vector<16x1xf32>
    %50 = vector.broadcast %49 : vector<16x1xf32> to vector<16x128xf32>
    %51 = arith.subf %45, %50 : vector<16x128xf32>
    %52 = arith.mulf %51, %51 : vector<16x128xf32>
    %cst_23 = arith.constant dense<0.000000e+00> : vector<16xf32>
    %53 = vector.multi_reduction <add>, %52, %cst_23 [1] : vector<16x128xf32> to vector<16xf32>
    %54 = vector.shape_cast %53 : vector<16xf32> to vector<16x1xf32>
    %cst_24 = arith.constant 1.280000e+02 : f32
    %55 = vector.broadcast %cst_24 : f32 to vector<16x1xf32>
    %56 = arith.divf %54, %55 : vector<16x1xf32>
    %cst_25 = arith.constant 9.99999974E-6 : f32
    %57 = vector.broadcast %cst_25 : f32 to vector<16x1xf32>
    %58 = arith.addf %56, %57 : vector<16x1xf32>
    %59 = math.rsqrt %58 : vector<16x1xf32>
    %60 = vector.broadcast %59 : vector<16x1xf32> to vector<16x128xf32>
    %61 = arith.mulf %51, %60 : vector<16x128xf32>
    %c0_26 = arith.constant 0 : index
    %c0_27 = arith.constant 0 : index
    %62 = vector.load %arg4[%c0_26, %c0_27] : memref<1x128xf32, #tpu.memory_space<vmem>>, vector<1x128xf32>
    %63 = vector.broadcast %62 : vector<1x128xf32> to vector<16x128xf32>
    %64 = arith.mulf %61, %63 : vector<16x128xf32>
    %c0_28 = arith.constant 0 : index
    %c0_29 = arith.constant 0 : index
    %65 = vector.load %arg5[%c0_28, %c0_29] : memref<1x128xf32, #tpu.memory_space<vmem>>, vector<1x128xf32>
    %66 = vector.broadcast %65 : vector<1x128xf32> to vector<16x128xf32>
    %67 = arith.addf %64, %66 : vector<16x128xf32>
    %c0_30 = arith.constant 0 : index
    %c0_31 = arith.constant 0 : index
    %68 = vector.load %arg6[%c0_30, %c0_31] : memref<16x128xf32, #tpu.memory_space<vmem>>, vector<16x128xf32>
    tpu.vector_store %arg6[%c0_30, %c0_31], %67 {strides = array<i32>} : memref<16x128xf32, #tpu.memory_space<vmem>>, vector<16x128xf32>,
    return
  }
  func.func @transform_0(%arg0: i32) -> (i32, i32) {
    %c0_i32 = arith.constant 0 : i32
    %c0_i32_0 = arith.constant 0 : i32
    return %arg0, %c0_i32 : i32, i32
  }
  func.func @transform_1(%arg0: i32) -> (i32, i32) {
    %c0_i32 = arith.constant 0 : i32
    %c0_i32_0 = arith.constant 0 : i32
    %c0_i32_1 = arith.constant 0 : i32
    return %c0_i32, %c0_i32_0 : i32, i32
  }
  func.func @transform_2(%arg0: i32) -> (i32, i32) {
    %c0_i32 = arith.constant 0 : i32
    %c0_i32_0 = arith.constant 0 : i32
    %c0_i32_1 = arith.constant 0 : i32
    return %c0_i32, %c0_i32_0 : i32, i32
  }
  func.func @transform_3(%arg0: i32) -> (i32, i32) {
    %c0_i32 = arith.constant 0 : i32
    %c0_i32_0 = arith.constant 0 : i32
    %c0_i32_1 = arith.constant 0 : i32
    return %c0_i32, %c0_i32_0 : i32, i32
  }
  func.func @transform_4(%arg0: i32) -> (i32, i32) {
    %c0_i32 = arith.constant 0 : i32
    %c0_i32_0 = arith.constant 0 : i32
    %c0_i32_1 = arith.constant 0 : i32
    return %c0_i32, %c0_i32_0 : i32, i32
  }
  func.func @transform_5(%arg0: i32) -> (i32, i32) {
    %c0_i32 = arith.constant 0 : i32
    %c0_i32_0 = arith.constant 0 : i32
    return %arg0, %c0_i32 : i32, i32
  }
}

</mosaic_0001>

<llo_original>
// kernel: tpu_custom_call.1
$region0: #{tpu_custom_call.1}
  #allocation0 [shape = 'u32[]', space=smem, size = 0x4, offset = 0x4, fixed_abs, tag = 'smem constant byte address 0x4 - core index']
  #allocation1 [shape = 'u32[144,128]{1,0:T(1,128)}', space=vmem, size = 0x12000, scoped, tag = 'internal scratch']
  %s0 = inlined_call_operand.hbm [shape: f32[16,128], index: 0, kind: input, shape index: {}]
  %s1 = inlined_call_operand.hbm [shape: f32[128,256], index: 1, kind: input, shape index: {}]
  %s2 = inlined_call_operand.hbm [shape: f32[256,128], index: 2, kind: input, shape index: {}]
  %s3 = inlined_call_operand.vmem [shape: f32[1,128], index: 3, kind: input, shape index: {}]
  %s4 = inlined_call_operand.vmem [shape: f32[1,128], index: 4, kind: input, shape index: {}]
  %s5 = inlined_call_operand.hbm [shape: f32[16,128], index: 5, kind: output, shape index: {}]
  %s6 = sld [smem:[#allocation0]]
  $region42: #{tpu_custom_call.1} parent=0
    _
  %s8 = ssub.s32 1, %s6
  %s9 = scalar_select 0, %s8, %s6
  $region1: #{tpu_custom_call.1} parent=0
    #allocation2 [shape = 'u8[8192]{0}', space=vmem, size = 0x2000, scoped, tag = 'input window, operand 0, single buffered']
    #allocation3 [shape = 's32[1]{0}', space=sflag, size = 0x4, scoped, tag = 'scoped memory for tpu_custom_call.1']
    #allocation4 [shape = 's32[1]{0}', space=sflag, size = 0x4, scoped, tag = 'scoped memory for tpu_custom_call.1']
    #allocation5 [shape = 'u8[131072]{0}', space=vmem, size = 0x20000, scoped, tag = 'input window, operand 1, single buffered']
    #allocation6 [shape = 's32[1]{0}', space=sflag, size = 0x4, scoped, tag = 'scoped memory for tpu_custom_call.1']
    #allocation7 [shape = 'u8[131072]{0}', space=vmem, size = 0x20000, scoped, tag = 'input window, operand 2, single buffered']
    #allocation8 [shape = 'u8[8192]{0}', space=vmem, size = 0x2000, scoped, tag = 'output window, operand 0, single buffered']
    %10 = vsyncpa [#allocation3], 0
    %11 = vsyncpa [#allocation6], 0
    %12 = vsyncpa [#allocation4], 0
    // Predicated region
    $region2: #{tpu_custom_call.1} parent=1 // pred_check
      _
    $region3: #{tpu_custom_call.1} parent=1 // pred_check_branch
      %14 = sbr.rel (0) target = $region5
    $region4: #{tpu_custom_call.1} parent=1 // pred_region
      %s16 = ssub.s32 256, 256
      %17 = vsyncadd [#allocation3], %s16
      %s18 = sshll.u32 [#allocation2], 4
      %s19 = int_to_ptr.vmem [resolvable:$true] %s18
      %24 = dma.hbm_to_vmem [thread:$0]  %s0, 256, %s19, [#allocation3], 128, 128, 8
    $region5: #{tpu_custom_call.1} parent=1 // pred_fallthru
      _
    // Predicated region
    $region6: #{tpu_custom_call.1} parent=1 // pred_check
      _
    $region7: #{tpu_custom_call.1} parent=1 // pred_check_branch
      %26 = sbr.rel (0) target = $region9
    $region8: #{tpu_custom_call.1} parent=1 // pred_region
      %s28 = ssub.s32 4096, 4096
      %29 = vsyncadd [#allocation6], %s28
      %s30 = sshll.u32 [#allocation5], 4
      %s31 = int_to_ptr.vmem [resolvable:$true] %s30
      %36 = dma.hbm_to_vmem [thread:$0]  %s1, 4096, %s31, [#allocation6], 256, 256, 16
    $region9: #{tpu_custom_call.1} parent=1 // pred_fallthru
      _
    // Predicated region
    $region10: #{tpu_custom_call.1} parent=1 // pred_check
      _
    $region11: #{tpu_custom_call.1} parent=1 // pred_check_branch
      %38 = sbr.rel (0) target = $region13
    $region12: #{tpu_custom_call.1} parent=1 // pred_region
      %s40 = ssub.s32 4096, 4096
      %41 = vsyncadd [#allocation6], %s40
      %s42 = sshll.u32 [#allocation7], 4
      %s43 = int_to_ptr.vmem [resolvable:$true] %s42
      %48 = dma.hbm_to_vmem [thread:$0]  %s2, 4096, %s43, [#allocation6], 128, 128, 8
    $region13: #{tpu_custom_call.1} parent=1 // pred_fallthru
      _
    // Predicated region
    $region14: #{tpu_custom_call.1} parent=1 // pred_check
      _
    $region15: #{tpu_custom_call.1} parent=1 // pred_check_branch
      %50 = sbr.rel (0) target = $region17
    $region16: #{tpu_custom_call.1} parent=1 // pred_region
      _
    $region17: #{tpu_custom_call.1} parent=1 // pred_fallthru
      _
    // Predicated region
    $region18: #{tpu_custom_call.1} parent=1 // pred_check
      _
    $region19: #{tpu_custom_call.1} parent=1 // pred_check_branch
      %52 = sbr.rel (0) target = $region21
    $region20: #{tpu_custom_call.1} parent=1 // pred_region
      _
    $region21: #{tpu_custom_call.1} parent=1 // pred_fallthru
      _
    // Predicated region
    $region22: #{tpu_custom_call.1} parent=1 // pred_check
      _
    $region23: #{tpu_custom_call.1} parent=1 // pred_check_branch
      %54 = sbr.rel (0) target = $region25
    $region24: #{tpu_custom_call.1} parent=1 // pred_region
      %55 = dma.done [#allocation3], 256
    $region25: #{tpu_custom_call.1} parent=1 // pred_fallthru
      _
    // Predicated region
    $region26: #{tpu_custom_call.1} parent=1 // pred_check
      _
    $region27: #{tpu_custom_call.1} parent=1 // pred_check_branch
      %57 = sbr.rel (0) target = $region29
    $region28: #{tpu_custom_call.1} parent=1 // pred_region
      %58 = dma.done [#allocation6], 4096
    $region29: #{tpu_custom_call.1} parent=1 // pred_fallthru
      _
    // Predicated region
    $region30: #{tpu_custom_call.1} parent=1 // pred_check
      _
    $region31: #{tpu_custom_call.1} parent=1 // pred_check_branch
      %60 = sbr.rel (0) target = $region33
    $region32: #{tpu_custom_call.1} parent=1 // pred_region
      %61 = dma.done [#allocation6], 4096
    $region33: #{tpu_custom_call.1} parent=1 // pred_fallthru
      _
    %v62 = vld [vmem:[#allocation2] sm:$0xff]
    %v63 = vld [vmem:[#allocation2 + $0x8] sm:$0xff]
    %v64 = vld [vmem:[#allocation5] sm:$0xff]
    %v65 = vld [vmem:[#allocation5 + $0x8] sm:$0xff]
    %v66 = vld [vmem:[#allocation5 + $0x10] sm:$0xff]
    %v67 = vld [vmem:[#allocation5 + $0x18] sm:$0xff]
    %v68 = vld [vmem:[#allocation5 + $0x20] sm:$0xff]
    %v69 = vld [vmem:[#allocation5 + $0x28] sm:$0xff]
    %v70 = vld [vmem:[#allocation5 + $0x30] sm:$0xff]
    %v71 = vld [vmem:[#allocation5 + $0x38] sm:$0xff]
    %v72 = vld [vmem:[#allocation5 + $0x40] sm:$0xff]
    %v73 = vld [vmem:[#allocation5 + $0x48] sm:$0xff]
    %v74 = vld [vmem:[#allocation5 + $0x50] sm:$0xff]
    %v75 = vld [vmem:[#allocation5 + $0x58] sm:$0xff]
    %v76 = vld [vmem:[#allocation5 + $0x60] sm:$0xff]
    %v77 = vld [vmem:[#allocation5 + $0x68] sm:$0xff]
    %v78 = vld [vmem:[#allocation5 + $0x70] sm:$0xff]
    %v79 = vld [vmem:[#allocation5 + $0x78] sm:$0xff]
    %v80 = vld [vmem:[#allocation5 + $0x80] sm:$0xff]
    %v81 = vld [vmem:[#allocation5 + $0x88] sm:$0xff]
    %v82 = vld [vmem:[#allocation5 + $0x90] sm:$0xff]
    %v83 = vld [vmem:[#allocation5 + $0x98] sm:$0xff]
    %v84 = vld [vmem:[#allocation5 + $0xa0] sm:$0xff]
    %v85 = vld [vmem:[#allocation5 + $0xa8] sm:$0xff]
    %v86 = vld [vmem:[#allocation5 + $0xb0] sm:$0xff]
    %v87 = vld [vmem:[#allocation5 + $0xb8] sm:$0xff]
    %v88 = vld [vmem:[#allocation5 + $0xc0] sm:$0xff]
    %v89 = vld [vmem:[#allocation5 + $0xc8] sm:$0xff]
    %v90 = vld [vmem:[#allocation5 + $0xd0] sm:$0xff]
    %v91 = vld [vmem:[#allocation5 + $0xd8] sm:$0xff]
    %v92 = vld [vmem:[#allocation5 + $0xe0] sm:$0xff]
    %v93 = vld [vmem:[#allocation5 + $0xe8] sm:$0xff]
    %v94 = vld [vmem:[#allocation5 + $0xf0] sm:$0xff]
    %v95 = vld [vmem:[#allocation5 + $0xf8] sm:$0xff]
    %96 = vmatprep.subr.mxu0 %v65
    %97 = vmatpush1.msra.mxu0 %v64
    %98 = vmatprep.subr.mxu0 %v67
    %99 = vmatpush1.msra.mxu0 %v66
    %100 = vmatprep.subr.mxu0 %v69
    %101 = vmatpush1.msra.mxu0 %v68
    %102 = vmatprep.subr.mxu0 %v71
    %103 = vmatpush1.msra.mxu0 %v70
    %104 = vmatprep.subr.mxu0 %v73
    %105 = vmatpush1.msra.mxu0 %v72
    %106 = vmatprep.subr.mxu0 %v75
    %107 = vmatpush1.msra.mxu0 %v74
    %108 = vmatprep.subr.mxu0 %v77
    %109 = vmatpush1.msra.mxu0 %v76
    %110 = vmatprep.subr.mxu0 %v79
    %111 = vmatpush1.msra.mxu0 %v78
    %112 = vmatprep.subr.mxu0 %v81
    %113 = vmatpush1.msra.mxu0 %v80
    %114 = vmatprep.subr.mxu0 %v83
    %115 = vmatpush1.msra.mxu0 %v82
    %116 = vmatprep.subr.mxu0 %v85
    %117 = vmatpush1.msra.mxu0 %v84
    %118 = vmatprep.subr.mxu0 %v87
    %119 = vmatpush1.msra.mxu0 %v86
    %120 = vmatprep.subr.mxu0 %v89
    %121 = vmatpush1.msra.mxu0 %v88
    %122 = vmatprep.subr.mxu0 %v91
    %123 = vmatpush1.msra.mxu0 %v90
    %124 = vmatprep.subr.mxu0 %v93
    %125 = vmatpush1.msra.mxu0 %v92
    %126 = vmatprep.subr.mxu0 %v95
    %127 = vmatpush1.msra.mxu0 %v94
    %128 = vmatprep.subr.mxu0 0.0
    %129 = vmatpush1.msra.mxu0 0.0
    %130 = vmatprep.subr.mxu0 0.0
    %131 = vmatpush1.msra.mxu0 0.0
    %132 = vmatprep.subr.mxu0 0.0
    %133 = vmatpush1.msra.mxu0 0.0
    %134 = vmatprep.subr.mxu0 0.0
    %135 = vmatpush1.msra.mxu0 0.0
    %136 = vmatprep.subr.mxu0 0.0
    %137 = vmatpush1.msra.mxu0 0.0
    %138 = vmatprep.subr.mxu0 0.0
    %139 = vmatpush1.msra.mxu0 0.0
    %140 = vmatprep.subr.mxu0 0.0
    %141 = vmatpush1.msra.mxu0 0.0
    %142 = vmatprep.subr.mxu0 0.0
    %143 = vmatpush1.msra.mxu0 0.0
    %144 = vmatprep.subr.mxu0 0.0
    %145 = vmatpush1.msra.mxu0 0.0
    %146 = vmatprep.subr.mxu0 0.0
    %147 = vmatpush1.msra.mxu0 0.0
    %148 = vmatprep.subr.mxu0 0.0
    %149 = vmatpush1.msra.mxu0 0.0
    %150 = vmatprep.subr.mxu0 0.0
    %151 = vmatpush1.msra.mxu0 0.0
    %152 = vmatprep.subr.mxu0 0.0
    %153 = vmatpush1.msra.mxu0 0.0
    %154 = vmatprep.subr.mxu0 0.0
    %155 = vmatpush1.msra.mxu0 0.0
    %156 = vmatprep.subr.mxu0 0.0
    %157 = vmatpush1.msra.mxu0 0.0
    %158 = vmatprep.subr.mxu0 0.0
    %159 = vmatpush1.msra.mxu0 0.0
    %160 = vmatprep.mubr.f32.mxu0 0.0
    %161 = vmatmul.mubr.f32.gmra.mrb[0].mxu0 %v62
    %v162 = vpop.f32.mrb[0].mxu0
    %v163 = vadd.f32 0.0, %v162
    %v164 = vpop.f32.mrb[0].mxu0
    %v165 = vadd.f32 0.0, %v164
    %166 = vmatprep.mubr.f32.mxu0 0.0
    %167 = vmatmul.mubr.f32.gmra.mrb[0].mxu0 %v63
    %v168 = vpop.f32.mrb[0].mxu0
    %v169 = vadd.f32 0.0, %v168
    %v170 = vpop.f32.mrb[0].mxu0
    %v171 = vadd.f32 0.0, %v170
    %172 = vdwg.mxu0
    %v173 = vmul.f32 %v163, 0.5
    %v174 = vmul.f32 %v165, 0.5
    %v175 = vmul.f32 %v169, 0.5
    %v176 = vmul.f32 %v171, 0.5
    %v177 = vmul.f32 %v163, 0.70710677
    %v178 = vmul.f32 %v165, 0.70710677
    %v179 = vmul.f32 %v169, 0.70710677
    %v180 = vmul.f32 %v171, 0.70710677
    %v181 = vand.u32 2147483647, %v177
    %v182 = vand.u32 2147483647, %v178
    %v183 = vand.u32 2147483647, %v179
    %v184 = vand.u32 2147483647, %v180
    %v185 = vmul.f32 %v181, 0.3275911
    %v186 = vmul.f32 %v182, 0.3275911
    %v187 = vmul.f32 %v183, 0.3275911
    %v188 = vmul.f32 %v184, 0.3275911
    %v189 = vadd.f32 %v185, 1.0
    %v190 = vadd.f32 %v186, 1.0
    %v191 = vadd.f32 %v187, 1.0
    %v192 = vadd.f32 %v188, 1.0
    %v193 = vrcp.pop %v189
    %v194 = vmul.f32 1.0, %v193
    %v195 = vrcp.pop %v190
    %v196 = vmul.f32 1.0, %v195
    %v197 = vrcp.pop %v191
    %v198 = vmul.f32 1.0, %v197
    %v199 = vrcp.pop %v192
    %v200 = vmul.f32 1.0, %v199
    %v201 = vmul.f32 %v194, 1.0614054
    %v202 = vmul.f32 %v196, 1.0614054
    %v203 = vmul.f32 %v198, 1.0614054
    %v204 = vmul.f32 %v200, 1.0614054
    %v205 = vadd.f32 %v201, -1.4531521
    %v206 = vadd.f32 %v202, -1.4531521
    %v207 = vadd.f32 %v203, -1.4531521
    %v208 = vadd.f32 %v204, -1.4531521
    %v209 = vmul.f32 %v194, %v205
    %v210 = vmul.f32 %v196, %v206
    %v211 = vmul.f32 %v198, %v207
    %v212 = vmul.f32 %v200, %v208
    %v213 = vadd.f32 %v209, 1.4214138
    %v214 = vadd.f32 %v210, 1.4214138
    %v215 = vadd.f32 %v211, 1.4214138
    %v216 = vadd.f32 %v212, 1.4214138
    %v217 = vmul.f32 %v194, %v213
    %v218 = vmul.f32 %v196, %v214
    %v219 = vmul.f32 %v198, %v215
    %v220 = vmul.f32 %v200, %v216
    %v221 = vadd.f32 %v217, -0.28449672
    %v222 = vadd.f32 %v218, -0.28449672
    %v223 = vadd.f32 %v219, -0.28449672
    %v224 = vadd.f32 %v220, -0.28449672
    %v225 = vmul.f32 %v194, %v221
    %v226 = vmul.f32 %v196, %v222
    %v227 = vmul.f32 %v198, %v223
    %v228 = vmul.f32 %v200, %v224
    %v229 = vadd.f32 %v225, 0.2548296
    %v230 = vadd.f32 %v226, 0.2548296
    %v231 = vadd.f32 %v227, 0.2548296
    %v232 = vadd.f32 %v228, 0.2548296
    %v233 = vmul.f32 %v194, %v229
    %v234 = vmul.f32 %v196, %v230
    %v235 = vmul.f32 %v198, %v231
    %v236 = vmul.f32 %v200, %v232
    %v237 = vsub.f32 0.0, %v181
    %v238 = vsub.f32 0.0, %v182
    %v239 = vsub.f32 0.0, %v183
    %v240 = vsub.f32 0.0, %v184
    %v241 = vmul.f32 %v237, %v181
    %v242 = vmul.f32 %v238, %v182
    %v243 = vmul.f32 %v239, %v183
    %v244 = vmul.f32 %v240, %v184
    %v245 = vmul.f32 %v241, 1.442695
    %v246 = vpow.pop %v245
    %v247 = vmul.f32 %v242, 1.442695
    %v248 = vpow.pop %v247
    %v249 = vmul.f32 %v243, 1.442695
    %v250 = vpow.pop %v249
    %v251 = vmul.f32 %v244, 1.442695
    %v252 = vpow.pop %v251
    %v253 = vmul.f32 %v233, %v246
    %v254 = vmul.f32 %v234, %v248
    %v255 = vmul.f32 %v235, %v250
    %v256 = vmul.f32 %v236, %v252
    %v257 = vsub.f32 1.0, %v253
    %v258 = vsub.f32 1.0, %v254
    %v259 = vsub.f32 1.0, %v255
    %v260 = vsub.f32 1.0, %v256
    %vm261 = vcmp.lt.f32.partialorder %v177, 0.0
    %vm262 = vcmp.lt.f32.partialorder %v178, 0.0
    %vm263 = vcmp.lt.f32.partialorder %v179, 0.0
    %vm264 = vcmp.lt.f32.partialorder %v180, 0.0
    %v265 = vsub.f32 0.0, %v257
    %v266 = vsub.f32 0.0, %v258
    %v267 = vsub.f32 0.0, %v259
    %v268 = vsub.f32 0.0, %v260
    %v269 = vsel %vm261, %v265, %v257
    %v270 = vsel %vm262, %v266, %v258
    %v271 = vsel %vm263, %v267, %v259
    %v272 = vsel %vm264, %v268, %v260
    %v273 = vadd.f32 %v269, 1.0
    %v274 = vadd.f32 %v270, 1.0
    %v275 = vadd.f32 %v271, 1.0
    %v276 = vadd.f32 %v272, 1.0
    %v277 = vmul.f32 %v173, %v273
    %v278 = vmul.f32 %v174, %v274
    %v279 = vmul.f32 %v175, %v275
    %v280 = vmul.f32 %v176, %v276
    %v281 = vld [vmem:[#allocation7] sm:$0xff]
    %v282 = vld [vmem:[#allocation7 + $0x8] sm:$0xff]
    %v283 = vld [vmem:[#allocation7 + $0x10] sm:$0xff]
    %v284 = vld [vmem:[#allocation7 + $0x18] sm:$0xff]
    %v285 = vld [vmem:[#allocation7 + $0x20] sm:$0xff]
    %v286 = vld [vmem:[#allocation7 + $0x28] sm:$0xff]
    %v287 = vld [vmem:[#allocation7 + $0x30] sm:$0xff]
    %v288 = vld [vmem:[#allocation7 + $0x38] sm:$0xff]
    %v289 = vld [vmem:[#allocation7 + $0x40] sm:$0xff]
    %v290 = vld [vmem:[#allocation7 + $0x48] sm:$0xff]
    %v291 = vld [vmem:[#allocation7 + $0x50] sm:$0xff]
    %v292 = vld [vmem:[#allocation7 + $0x58] sm:$0xff]
    %v293 = vld [vmem:[#allocation7 + $0x60] sm:$0xff]
    %v294 = vld [vmem:[#allocation7 + $0x68] sm:$0xff]
    %v295 = vld [vmem:[#allocation7 + $0x70] sm:$0xff]
    %v296 = vld [vmem:[#allocation7 + $0x78] sm:$0xff]
    %v297 = vld [vmem:[#allocation7 + $0x80] sm:$0xff]
    %v298 = vld [vmem:[#allocation7 + $0x88] sm:$0xff]
    %v299 = vld [vmem:[#allocation7 + $0x90] sm:$0xff]
    %v300 = vld [vmem:[#allocation7 + $0x98] sm:$0xff]
    %v301 = vld [vmem:[#allocation7 + $0xa0] sm:$0xff]
    %v302 = vld [vmem:[#allocation7 + $0xa8] sm:$0xff]
    %v303 = vld [vmem:[#allocation7 + $0xb0] sm:$0xff]
    %v304 = vld [vmem:[#allocation7 + $0xb8] sm:$0xff]
    %v305 = vld [vmem:[#allocation7 + $0xc0] sm:$0xff]
    %v306 = vld [vmem:[#allocation7 + $0xc8] sm:$0xff]
    %v307 = vld [vmem:[#allocation7 + $0xd0] sm:$0xff]
    %v308 = vld [vmem:[#allocation7 + $0xd8] sm:$0xff]
    %v309 = vld [vmem:[#allocation7 + $0xe0] sm:$0xff]
    %v310 = vld [vmem:[#allocation7 + $0xe8] sm:$0xff]
    %v311 = vld [vmem:[#allocation7 + $0xf0] sm:$0xff]
    %v312 = vld [vmem:[#allocation7 + $0xf8] sm:$0xff]
    %313 = vmatprep.subr.mxu0 0.0
    %314 = vmatpush1.msra.mxu0 %v281
    %315 = vmatprep.subr.mxu0 0.0
    %316 = vmatpush1.msra.mxu0 %v282
    %317 = vmatprep.subr.mxu0 0.0
    %318 = vmatpush1.msra.mxu0 %v283
    %319 = vmatprep.subr.mxu0 0.0
    %320 = vmatpush1.msra.mxu0 %v284
    %321 = vmatprep.subr.mxu0 0.0
    %322 = vmatpush1.msra.mxu0 %v285
    %323 = vmatprep.subr.mxu0 0.0
    %324 = vmatpush1.msra.mxu0 %v286
    %325 = vmatprep.subr.mxu0 0.0
    %326 = vmatpush1.msra.mxu0 %v287
    %327 = vmatprep.subr.mxu0 0.0
    %328 = vmatpush1.msra.mxu0 %v288
    %329 = vmatprep.subr.mxu0 0.0
    %330 = vmatpush1.msra.mxu0 %v289
    %331 = vmatprep.subr.mxu0 0.0
    %332 = vmatpush1.msra.mxu0 %v290
    %333 = vmatprep.subr.mxu0 0.0
    %334 = vmatpush1.msra.mxu0 %v291
    %335 = vmatprep.subr.mxu0 0.0
    %336 = vmatpush1.msra.mxu0 %v292
    %337 = vmatprep.subr.mxu0 0.0
    %338 = vmatpush1.msra.mxu0 %v293
    %339 = vmatprep.subr.mxu0 0.0
    %340 = vmatpush1.msra.mxu0 %v294
    %341 = vmatprep.subr.mxu0 0.0
    %342 = vmatpush1.msra.mxu0 %v295
    %343 = vmatprep.subr.mxu0 0.0
    %344 = vmatpush1.msra.mxu0 %v296
    %345 = vmatprep.subr.mxu0 0.0
    %346 = vmatpush1.msra.mxu0 %v297
    %347 = vmatprep.subr.mxu0 0.0
    %348 = vmatpush1.msra.mxu0 %v298
    %349 = vmatprep.subr.mxu0 0.0
    %350 = vmatpush1.msra.mxu0 %v299
    %351 = vmatprep.subr.mxu0 0.0
    %352 = vmatpush1.msra.mxu0 %v300
    %353 = vmatprep.subr.mxu0 0.0
    %354 = vmatpush1.msra.mxu0 %v301
    %355 = vmatprep.subr.mxu0 0.0
    %356 = vmatpush1.msra.mxu0 %v302
    %357 = vmatprep.subr.mxu0 0.0
    %358 = vmatpush1.msra.mxu0 %v303
    %359 = vmatprep.subr.mxu0 0.0
    %360 = vmatpush1.msra.mxu0 %v304
    %361 = vmatprep.subr.mxu0 0.0
    %362 = vmatpush1.msra.mxu0 %v305
    %363 = vmatprep.subr.mxu0 0.0
    %364 = vmatpush1.msra.mxu0 %v306
    %365 = vmatprep.subr.mxu0 0.0
    %366 = vmatpush1.msra.mxu0 %v307
    %367 = vmatprep.subr.mxu0 0.0
    %368 = vmatpush1.msra.mxu0 %v308
    %369 = vmatprep.subr.mxu0 0.0
    %370 = vmatpush1.msra.mxu0 %v309
    %371 = vmatprep.subr.mxu0 0.0
    %372 = vmatpush1.msra.mxu0 %v310
    %373 = vmatprep.subr.mxu0 0.0
    %374 = vmatpush1.msra.mxu0 %v311
    %375 = vmatprep.subr.mxu0 0.0
    %376 = vmatpush1.msra.mxu0 %v312
    %377 = vmatprep.mubr.f32.mxu0 %v278
    %378 = vmatmul.mubr.f32.gmra.mrb[0].mxu0 %v277
    %v379 = vpop.f32.mrb[0].mxu0
    %v380 = vadd.f32 %v62, %v379
    %v381 = vpop.f32.mrb[0].mxu0
    %382 = vmatprep.mubr.f32.mxu0 %v280
    %383 = vmatmul.mubr.f32.gmra.mrb[0].mxu0 %v279
    %v384 = vpop.f32.mrb[0].mxu0
    %v385 = vadd.f32 %v63, %v384
    %v386 = vpop.f32.mrb[0].mxu0
    %387 = vdwg.mxu0
    %388 = vadd.xlane.f32.xlu0 %v380
    %v389 = vpop.xlane.xlu0 %388
    %390 = vadd.xlane.f32.xlu0 %v385
    %v391 = vpop.xlane.xlu0 %390
    %v392 = vrcp.pop 128.0
    %v393 = vmul.f32 %v389, %v392
    %v394 = vmul.f32 %v391, %v392
    %v395 = vsub.f32 %v380, %v393
    %v396 = vsub.f32 %v385, %v394
    %v397 = vmul.f32 %v395, %v395
    %v398 = vmul.f32 %v396, %v396
    %399 = vadd.xlane.f32.xlu0 %v397
    %v400 = vpop.xlane.xlu0 %399
    %401 = vadd.xlane.f32.xlu0 %v398
    %v402 = vpop.xlane.xlu0 %401
    %v403 = vmul.f32 %v400, %v392
    %v404 = vmul.f32 %v402, %v392
    %v405 = vadd.f32 %v403, 1e-05
    %v406 = vadd.f32 %v404, 1e-05
    %v407 = vrsqrt.pop %v405
    %v408 = vrsqrt.pop %v406
    %v409 = vmul.f32 %v395, %v407
    %v410 = vmul.f32 %v396, %v408
    %v411 = vld [vmem:[%s3] sm:$0x1]
    %v413 = vlaneseq
    %v414 = vshrl.u32 %v413, 7
    %v415 = vsub.s32 0, %v414
    %v416 = vrot.slane %v411, %v415
    %v418 = vmul.f32 %v409, %v416
    %v419 = vmul.f32 %v410, %v416
    %v420 = vld [vmem:[%s4] sm:$0x1]
    %v422 = vlaneseq
    %v423 = vshrl.u32 %v422, 7
    %v424 = vsub.s32 0, %v423
    %v425 = vrot.slane %v420, %v424
    %v427 = vadd.f32 %v418, %v425
    %v428 = vadd.f32 %v419, %v425
    %429 = vst [vmem:[#allocation8] sm:$0xff] %v427
    %430 = vst [vmem:[#allocation8 + $0x8] sm:$0xff] %v428
    // Predicated region
    $region34: #{tpu_custom_call.1} parent=1 // pred_check
      _
    $region35: #{tpu_custom_call.1} parent=1 // pred_check_branch
      %432 = sbr.rel (0) target = $region37
    $region36: #{tpu_custom_call.1} parent=1 // pred_region
      %s434 = ssub.s32 256, 256
      %435 = vsyncadd [#allocation4], %s434
      %s436 = sshll.u32 [#allocation8], 4
      %s437 = int_to_ptr.vmem [resolvable:$true] %s436
      %442 = dma.vmem_to_hbm [thread:$0]  %s437, 256, %s5, [#allocation4], 128, 128, 8
    $region37: #{tpu_custom_call.1} parent=1 // pred_fallthru
      _
    // Predicated region
    $region38: #{tpu_custom_call.1} parent=1 // pred_check
      _
    $region39: #{tpu_custom_call.1} parent=1 // pred_check_branch
      %444 = sbr.rel (0) target = $region41
    $region40: #{tpu_custom_call.1} parent=1 // pred_region
      %445 = dma.done [#allocation4], 256
    $region41: #{tpu_custom_call.1} parent=1 // pred_fallthru
      _
    %446 = vsyncpa [#allocation3], 1
    %447 = vsyncpa [#allocation6], 1
    %448 = vsyncpa [#allocation4], 1

</llo_original>
